<compile_context>
chip_gen: v7x
topology: tpu7x:2x2x1
jax: 0.10.0
libtpu: 0.0.40
codegen_flags: <defaults>
</compile_context>

<pallas_src>
import functools

import jax
import jax.numpy as jnp
from jax import lax
from jax.experimental import pallas as pl
from jax.experimental.pallas import tpu as pltpu


def _round_up(x, m):
    return ((x + m - 1) // m) * m


def _rnn_chunk_kernel(xproj_ref, h0_ref, wh_ref, selmask_ref, out_ref, h_scratch,
                      *, t_chunk):
    """One grid step = one (batch tile, time chunk).

    Per timestep (xproj already holds x @ W_x + bias):
        z      = xproj[t] + h @ W_h
        packed = [ z[:, :hidden] | log_softmax(z[:, hidden:hidden+out]) | 0 pad ]
    packed doubles as the carried hidden state (W_h rows >= hidden are zero).
    """
    c = pl.program_id(1)          # time-chunk index (inner, "arbitrary")

    @pl.when(c == 0)
    def _():
        h_scratch[...] = h0_ref[...]

    # Hoisted once per chunk (JAX does not CSE broadcast_in_dim).
    sel_f = selmask_ref[...]                  # (1, n_pad): 1.0 on logit columns
    sel_b = sel_f > 0.0
    wh = wh_ref[...]

    def step(t, h):
        z = xproj_ref[t] + jnp.dot(h, wh, preferred_element_type=jnp.float32)
        # Finite mask (not -inf): an overflowing masked column can't produce NaN.
        masked = jnp.where(sel_b, z, jnp.float32(-1e30))
        m = jnp.max(masked, axis=1, keepdims=True)
        lse = jnp.log(jnp.sum(jnp.exp(masked - m), axis=1, keepdims=True))
        packed = z - (m + lse) * sel_f        # hidden / pad columns untouched
        out_ref[t] = packed                   # lane-dense 128-wide store
        return packed

    h_scratch[...] = lax.fori_loop(0, t_chunk, step, h_scratch[...], unroll=True)


def prepare_params(w_i2h, b_i2h, w_i2o, b_i2o):
    """Run once: transpose, fuse and pad the PyTorch-layout weights."""
    hidden_size, fan_in = w_i2h.shape
    output_size = w_i2o.shape[0]
    input_size = fan_in - hidden_size
    n = hidden_size + output_size
    n_pad = _round_up(n, 128)

    w_cat = jnp.concatenate([w_i2h.T, w_i2o.T], axis=1).astype(jnp.float32)  # (fan_in, n)
    wx = jnp.zeros((input_size, n_pad), jnp.float32).at[:, :n].set(w_cat[:input_size])
    # NOTE: rows >= hidden_size of wh MUST stay exactly zero (recurrence relies
    # on it because the carried row also holds logp / pad columns).
    wh = jnp.zeros((n_pad, n_pad), jnp.float32).at[:hidden_size, :n].set(w_cat[input_size:])
    b = (jnp.zeros((1, n_pad), jnp.float32)
         .at[0, :hidden_size].set(b_i2h.astype(jnp.float32))
         .at[0, hidden_size:n].set(b_i2o.astype(jnp.float32)))
    selmask = jnp.zeros((1, n_pad), jnp.float32).at[0, hidden_size:n].set(1.0)
    return dict(wx=wx, wh=wh, b=b, selmask=selmask,
                input_size=input_size, hidden_size=hidden_size,
                output_size=output_size, n_pad=n_pad)


@functools.partial(jax.jit,
                   static_argnames=("hidden_size", "output_size", "t_chunk", "b_tile"))
def rnn_sequence(x_seq, h0, wx, wh, b, selmask, *, hidden_size, output_size,
                 t_chunk=8, b_tile=8):
    """Runs T RNN steps. Returns (logp_seq, hidden_seq), each (T, B, ...)."""
    T, B, _ = x_seq.shape
    n_pad = wh.shape[1]

    # Hoisted non-recurrent projection (+ bias folded in): one M = T*B matmul.
    xproj = jnp.einsum("tbi,in->tbn", x_seq.astype(jnp.float32), wx,
                       precision=jax.lax.Precision.HIGHEST) + b        # (T, B, n_pad)

    # Pad time to a multiple of t_chunk, batch to a multiple of b_tile (>= 8 sublanes).
    t_pad = _round_up(T, t_chunk)
    b_pad = _round_up(max(B, b_tile), b_tile)
    xproj_p = jnp.zeros((t_pad, b_pad, n_pad), jnp.float32).at[:T, :B].set(xproj)
    h0_p = jnp.zeros((b_pad, n_pad), jnp.float32).at[:B, :hidden_size].set(
        h0.astype(jnp.float32))

    nb = b_pad // b_tile
    nc = t_pad // t_chunk
    kernel = functools.partial(_rnn_chunk_kernel, t_chunk=t_chunk)

    packed = pl.pallas_call(
        kernel,
        out_shape=jax.ShapeDtypeStruct((t_pad, b_pad, n_pad), jnp.float32),
        grid_spec=pltpu.PrefetchScalarGridSpec(
            num_scalar_prefetch=0,
            grid=(nb, nc),
            in_specs=[
                pl.BlockSpec((t_chunk, b_tile, n_pad), lambda bi, ci: (ci, bi, 0)),  # xproj chunk
                pl.BlockSpec((b_tile, n_pad), lambda bi, ci: (bi, 0)),               # h0 tile
                pl.BlockSpec((n_pad, n_pad), lambda bi, ci: (0, 0)),                 # W_h (resident)
                pl.BlockSpec((1, n_pad), lambda bi, ci: (0, 0)),                     # select-mask
            ],
            out_specs=pl.BlockSpec((t_chunk, b_tile, n_pad), lambda bi, ci: (ci, bi, 0)),
            scratch_shapes=[pltpu.VMEM((b_tile, n_pad), jnp.float32)],               # carried h
        ),
        compiler_params=pltpu.CompilerParams(
            # batch tiles independent (v7x megacore); time carries h -> sequential.
            dimension_semantics=("parallel", "arbitrary"),
            vmem_limit_bytes=32 * 1024 * 1024,
        ),
    )(xproj_p, h0_p, wh, selmask)

    hidden_seq = packed[:T, :B, :hidden_size]
    logp_seq = packed[:T, :B, hidden_size:hidden_size + output_size]
    return logp_seq, hidden_seq


def rnn_forward(x, h, params):
    """Single-step forward: identical semantics to the PyTorch module forward."""
    logp_seq, hidden_seq = rnn_sequence(
        x[None], h, params["wx"], params["wh"], params["b"], params["selmask"],
        hidden_size=params["hidden_size"], output_size=params["output_size"],
        t_chunk=1, b_tile=8)
    return logp_seq[0], hidden_seq[0]


def init_params(key, input_size, hidden_size, output_size):
    """Deterministic PyTorch-Linear-style init (uniform(-1/sqrt(fan_in), +))."""
    k1, k2, k3, k4 = jax.random.split(key, 4)
    fan_in = input_size + hidden_size
    bound = 1.0 / (fan_in ** 0.5)
    w_i2h = jax.random.uniform(k1, (hidden_size, fan_in), jnp.float32, -bound, bound)
    b_i2h = jax.random.uniform(k2, (hidden_size,), jnp.float32, -bound, bound)
    w_i2o = jax.random.uniform(k3, (output_size, fan_in), jnp.float32, -bound, bound)
    b_i2o = jax.random.uniform(k4, (output_size,), jnp.float32, -bound, bound)
    return w_i2h, b_i2h, w_i2o, b_i2o


if __name__ == "__main__":
    input_size, hidden_size, output_size = 16, 32, 8
    batch, seq_len = 2, 8

    key = jax.random.PRNGKey(0)
    kx, kp = jax.random.split(key)
    x_seq = jax.random.normal(kx, (seq_len, batch, input_size), jnp.float32)
    h0 = jnp.zeros((batch, hidden_size), jnp.float32)   # RNN.init_hidden() per row

    w_i2h, b_i2h, w_i2o, b_i2o = init_params(kp, input_size, hidden_size, output_size)
    params = prepare_params(w_i2h, b_i2h, w_i2o, b_i2o)   # hoisted, runs once

    # Fused-sequence kernel: time chunked inside the kernel, weights resident.
    logp_seq, hidden_seq = rnn_sequence(
        x_seq, h0, params["wx"], params["wh"], params["b"], params["selmask"],
        hidden_size=hidden_size, output_size=output_size,
        t_chunk=seq_len, b_tile=8)
    jax.block_until_ready((logp_seq, hidden_seq))

    # Pure-JAX reference (same math as the PyTorch module, stepped in Python).
    def ref_step(x, h):
        combined = jnp.concatenate([x, h], axis=1)
        hidden = jnp.dot(combined, w_i2h.T, precision=jax.lax.Precision.HIGHEST) + b_i2h
        logits = jnp.dot(combined, w_i2o.T, precision=jax.lax.Precision.HIGHEST) + b_i2o
        return jax.nn.log_softmax(logits, axis=1), hidden

    h = h0
    ref_logp, ref_hidden = [], []
    for t in range(seq_len):
        o, h = ref_step(x_seq[t], h)
        ref_logp.append(o)
        ref_hidden.append(h)
    ref_logp = jnp.stack(ref_logp)
    ref_hidden = jnp.stack(ref_hidden)

    assert jnp.allclose(logp_seq, ref_logp, atol=2e-4, rtol=2e-4), "output mismatch"
    assert jnp.allclose(hidden_seq, ref_hidden, atol=2e-4, rtol=2e-4), "hidden mismatch"

    # Single-step call matches the PyTorch module's forward(x, h) exactly.
    out1, h1 = rnn_forward(x_seq[0], h0, params)
    ro1, rh1 = ref_step(x_seq[0], h0)
    assert jnp.allclose(out1, ro1, atol=2e-4, rtol=2e-4), "single-step output mismatch"
    assert jnp.allclose(h1, rh1, atol=2e-4, rtol=2e-4), "single-step hidden mismatch"

    print("KERNEL_OK")
</pallas_src>

<mosaic_0001>
module attributes {stable_mosaic.version = 11 : i64} {
  func.func @_rnn_chunk_kernel(%arg0: i32, %arg1: i32, %arg2: memref<8x8x128xf32, #tpu.memory_space<vmem>>, %arg3: memref<8x128xf32, #tpu.memory_space<vmem>>, %arg4: memref<128x128xf32, #tpu.memory_space<vmem>>, %arg5: memref<1x128xf32, #tpu.memory_space<vmem>>, %arg6: memref<8x8x128xf32, #tpu.memory_space<vmem>>, %arg7: memref<8x128xf32, #tpu.memory_space<vmem>>) attributes {dimension_semantics = [#tpu.dimension_semantics<parallel>, #tpu.dimension_semantics<arbitrary>], iteration_bounds = array<i64: 1, 1>, scalar_prefetch = 0 : i64, scratch_operands = 1 : i64, tpu.core_type = #tpu.core_type<tc>, window_params = [{transform_indices = @transform_0, window_bounds = array<i64: 8, 8, 128>}, {transform_indices = @transform_1, window_bounds = array<i64: 8, 128>}, {pipeline_mode = #tpu.pipeline_mode<synchronous>, transform_indices = @transform_2, window_bounds = array<i64: 128, 128>}, {pipeline_mode = #tpu.pipeline_mode<synchronous>, transform_indices = @transform_3, window_bounds = array<i64: 1, 128>}, {transform_indices = @transform_4, window_bounds = array<i64: 8, 8, 128>}]} {
    %c0_i32 = arith.constant 0 : i32
    %0 = arith.cmpi eq, %arg1, %c0_i32 : i32
    %1 = arith.extui %0 : i1 to i32
    %c0_i32_0 = arith.constant 0 : i32
    %2 = arith.cmpi ne, %1, %c0_i32_0 : i32
    scf.if %2 {
      %c0_73 = arith.constant 0 : index
      %c0_74 = arith.constant 0 : index
      %217 = vector.load %arg3[%c0_73, %c0_74] : memref<8x128xf32, #tpu.memory_space<vmem>>, vector<8x128xf32>
      %c0_75 = arith.constant 0 : index
      %c0_76 = arith.constant 0 : index
      %218 = vector.load %arg7[%c0_75, %c0_76] : memref<8x128xf32, #tpu.memory_space<vmem>>, vector<8x128xf32>
      tpu.vector_store %arg7[%c0_75, %c0_76], %217 {strides = array<i32>} : memref<8x128xf32, #tpu.memory_space<vmem>>, vector<8x128xf32>,
    } else {
    }
    %c0 = arith.constant 0 : index
    %c0_1 = arith.constant 0 : index
    %3 = vector.load %arg5[%c0, %c0_1] : memref<1x128xf32, #tpu.memory_space<vmem>>, vector<1x128xf32>
    %cst = arith.constant 0.000000e+00 : f32
    %4 = vector.broadcast %cst : f32 to vector<1x128xf32>
    %5 = arith.cmpf ogt, %3, %4 : vector<1x128xf32>
    %c0_2 = arith.constant 0 : index
    %c0_3 = arith.constant 0 : index
    %6 = vector.load %arg4[%c0_2, %c0_3] : memref<128x128xf32, #tpu.memory_space<vmem>>, vector<128x128xf32>
    %c0_4 = arith.constant 0 : index
    %c0_5 = arith.constant 0 : index
    %7 = vector.load %arg7[%c0_4, %c0_5] : memref<8x128xf32, #tpu.memory_space<vmem>>, vector<8x128xf32>
    %c0_i32_6 = arith.constant 0 : i32
    %8 = arith.index_cast %c0_i32_6 : i32 to index
    %c0_7 = arith.constant 0 : index
    %c0_8 = arith.constant 0 : index
    %9 = vector.load %arg2[%8, %c0_7, %c0_8] : memref<8x8x128xf32, #tpu.memory_space<vmem>>, vector<1x8x128xf32>
    %10 = vector.shape_cast %9 : vector<1x8x128xf32> to vector<8x128xf32>
    %cst_9 = arith.constant dense<0.000000e+00> : vector<8x128xf32>
    %11 = tpu.matmul %7, %6, %cst_9 {dimension_numbers = #tpu.dot_dimension_numbers<[1], [0], [0], [1], [0, 0, 1, 1], [], []>} : vector<8x128xf32>, vector<128x128xf32>, vector<8x128xf32> -> vector<8x128xf32>
    %12 = arith.addf %10, %11 : vector<8x128xf32>
    %cst_10 = arith.constant -1.000000e+30 : f32
    %13 = vector.shape_cast %5 : vector<1x128xi1> to vector<1x128xi1>
    %14 = vector.broadcast %13 : vector<1x128xi1> to vector<8x128xi1>
    %15 = vector.broadcast %cst_10 : f32 to vector<8x128xf32>
    %16 = arith.select %14, %12, %15 : vector<8x128xi1>, vector<8x128xf32>
    %cst_11 = arith.constant dense<0xFF800000> : vector<8xf32>
    %17 = vector.multi_reduction <maximumf>, %16, %cst_11 [1] : vector<8x128xf32> to vector<8xf32>
    %18 = vector.shape_cast %17 : vector<8xf32> to vector<8x1xf32>
    %19 = vector.broadcast %18 : vector<8x1xf32> to vector<8x128xf32>
    %20 = arith.subf %16, %19 : vector<8x128xf32>
    %21 = math.exp %20 : vector<8x128xf32>
    %cst_12 = arith.constant dense<0.000000e+00> : vector<8xf32>
    %22 = vector.multi_reduction <add>, %21, %cst_12 [1] : vector<8x128xf32> to vector<8xf32>
    %23 = vector.shape_cast %22 : vector<8xf32> to vector<8x1xf32>
    %24 = math.log %23 : vector<8x1xf32>
    %25 = arith.addf %18, %24 : vector<8x1xf32>
    %26 = vector.broadcast %25 : vector<8x1xf32> to vector<8x128xf32>
    %27 = vector.broadcast %3 : vector<1x128xf32> to vector<8x128xf32>
    %28 = arith.mulf %26, %27 : vector<8x128xf32>
    %29 = arith.subf %12, %28 : vector<8x128xf32>
    %30 = arith.index_cast %c0_i32_6 : i32 to index
    %c0_13 = arith.constant 0 : index
    %c0_14 = arith.constant 0 : index
    %31 = vector.load %arg6[%30, %c0_13, %c0_14] : memref<8x8x128xf32, #tpu.memory_space<vmem>>, vector<1x8x128xf32>
    %32 = vector.shape_cast %31 : vector<1x8x128xf32> to vector<8x128xf32>
    %33 = vector.shape_cast %29 : vector<8x128xf32> to vector<1x8x128xf32>
    tpu.vector_store %arg6[%30, %c0_13, %c0_14], %33 {strides = array<i32>} : memref<8x8x128xf32, #tpu.memory_space<vmem>>, vector<1x8x128xf32>,
    %c1_i32 = arith.constant 1 : i32
    %34 = arith.index_cast %c1_i32 : i32 to index
    %c0_15 = arith.constant 0 : index
    %c0_16 = arith.constant 0 : index
    %35 = vector.load %arg2[%34, %c0_15, %c0_16] : memref<8x8x128xf32, #tpu.memory_space<vmem>>, vector<1x8x128xf32>
    %36 = vector.shape_cast %35 : vector<1x8x128xf32> to vector<8x128xf32>
    %cst_17 = arith.constant dense<0.000000e+00> : vector<8x128xf32>
    %37 = tpu.matmul %29, %6, %cst_17 {dimension_numbers = #tpu.dot_dimension_numbers<[1], [0], [0], [1], [0, 0, 1, 1], [], []>} : vector<8x128xf32>, vector<128x128xf32>, vector<8x128xf32> -> vector<8x128xf32>
    %38 = arith.addf %36, %37 : vector<8x128xf32>
    %cst_18 = arith.constant -1.000000e+30 : f32
    %39 = vector.shape_cast %5 : vector<1x128xi1> to vector<1x128xi1>
    %40 = vector.broadcast %39 : vector<1x128xi1> to vector<8x128xi1>
    %41 = vector.broadcast %cst_18 : f32 to vector<8x128xf32>
    %42 = arith.select %40, %38, %41 : vector<8x128xi1>, vector<8x128xf32>
    %cst_19 = arith.constant dense<0xFF800000> : vector<8xf32>
    %43 = vector.multi_reduction <maximumf>, %42, %cst_19 [1] : vector<8x128xf32> to vector<8xf32>
    %44 = vector.shape_cast %43 : vector<8xf32> to vector<8x1xf32>
    %45 = vector.broadcast %44 : vector<8x1xf32> to vector<8x128xf32>
    %46 = arith.subf %42, %45 : vector<8x128xf32>
    %47 = math.exp %46 : vector<8x128xf32>
    %cst_20 = arith.constant dense<0.000000e+00> : vector<8xf32>
    %48 = vector.multi_reduction <add>, %47, %cst_20 [1] : vector<8x128xf32> to vector<8xf32>
    %49 = vector.shape_cast %48 : vector<8xf32> to vector<8x1xf32>
    %50 = math.log %49 : vector<8x1xf32>
    %51 = arith.addf %44, %50 : vector<8x1xf32>
    %52 = vector.broadcast %51 : vector<8x1xf32> to vector<8x128xf32>
    %53 = vector.broadcast %3 : vector<1x128xf32> to vector<8x128xf32>
    %54 = arith.mulf %52, %53 : vector<8x128xf32>
    %55 = arith.subf %38, %54 : vector<8x128xf32>
    %56 = arith.index_cast %c1_i32 : i32 to index
    %c0_21 = arith.constant 0 : index
    %c0_22 = arith.constant 0 : index
    %57 = vector.load %arg6[%56, %c0_21, %c0_22] : memref<8x8x128xf32, #tpu.memory_space<vmem>>, vector<1x8x128xf32>
    %58 = vector.shape_cast %57 : vector<1x8x128xf32> to vector<8x128xf32>
    %59 = vector.shape_cast %55 : vector<8x128xf32> to vector<1x8x128xf32>
    tpu.vector_store %arg6[%56, %c0_21, %c0_22], %59 {strides = array<i32>} : memref<8x8x128xf32, #tpu.memory_space<vmem>>, vector<1x8x128xf32>,
    %c2_i32 = arith.constant 2 : i32
    %60 = arith.index_cast %c2_i32 : i32 to index
    %c0_23 = arith.constant 0 : index
    %c0_24 = arith.constant 0 : index
    %61 = vector.load %arg2[%60, %c0_23, %c0_24] : memref<8x8x128xf32, #tpu.memory_space<vmem>>, vector<1x8x128xf32>
    %62 = vector.shape_cast %61 : vector<1x8x128xf32> to vector<8x128xf32>
    %cst_25 = arith.constant dense<0.000000e+00> : vector<8x128xf32>
    %63 = tpu.matmul %55, %6, %cst_25 {dimension_numbers = #tpu.dot_dimension_numbers<[1], [0], [0], [1], [0, 0, 1, 1], [], []>} : vector<8x128xf32>, vector<128x128xf32>, vector<8x128xf32> -> vector<8x128xf32>
    %64 = arith.addf %62, %63 : vector<8x128xf32>
    %cst_26 = arith.constant -1.000000e+30 : f32
    %65 = vector.shape_cast %5 : vector<1x128xi1> to vector<1x128xi1>
    %66 = vector.broadcast %65 : vector<1x128xi1> to vector<8x128xi1>
    %67 = vector.broadcast %cst_26 : f32 to vector<8x128xf32>
    %68 = arith.select %66, %64, %67 : vector<8x128xi1>, vector<8x128xf32>
    %cst_27 = arith.constant dense<0xFF800000> : vector<8xf32>
    %69 = vector.multi_reduction <maximumf>, %68, %cst_27 [1] : vector<8x128xf32> to vector<8xf32>
    %70 = vector.shape_cast %69 : vector<8xf32> to vector<8x1xf32>
    %71 = vector.broadcast %70 : vector<8x1xf32> to vector<8x128xf32>
    %72 = arith.subf %68, %71 : vector<8x128xf32>
    %73 = math.exp %72 : vector<8x128xf32>
    %cst_28 = arith.constant dense<0.000000e+00> : vector<8xf32>
    %74 = vector.multi_reduction <add>, %73, %cst_28 [1] : vector<8x128xf32> to vector<8xf32>
    %75 = vector.shape_cast %74 : vector<8xf32> to vector<8x1xf32>
    %76 = math.log %75 : vector<8x1xf32>
    %77 = arith.addf %70, %76 : vector<8x1xf32>
    %78 = vector.broadcast %77 : vector<8x1xf32> to vector<8x128xf32>
    %79 = vector.broadcast %3 : vector<1x128xf32> to vector<8x128xf32>
    %80 = arith.mulf %78, %79 : vector<8x128xf32>
    %81 = arith.subf %64, %80 : vector<8x128xf32>
    %82 = arith.index_cast %c2_i32 : i32 to index
    %c0_29 = arith.constant 0 : index
    %c0_30 = arith.constant 0 : index
    %83 = vector.load %arg6[%82, %c0_29, %c0_30] : memref<8x8x128xf32, #tpu.memory_space<vmem>>, vector<1x8x128xf32>
    %84 = vector.shape_cast %83 : vector<1x8x128xf32> to vector<8x128xf32>
    %85 = vector.shape_cast %81 : vector<8x128xf32> to vector<1x8x128xf32>
    tpu.vector_store %arg6[%82, %c0_29, %c0_30], %85 {strides = array<i32>} : memref<8x8x128xf32, #tpu.memory_space<vmem>>, vector<1x8x128xf32>,
    %c3_i32 = arith.constant 3 : i32
    %86 = arith.index_cast %c3_i32 : i32 to index
    %c0_31 = arith.constant 0 : index
    %c0_32 = arith.constant 0 : index
    %87 = vector.load %arg2[%86, %c0_31, %c0_32] : memref<8x8x128xf32, #tpu.memory_space<vmem>>, vector<1x8x128xf32>
    %88 = vector.shape_cast %87 : vector<1x8x128xf32> to vector<8x128xf32>
    %cst_33 = arith.constant dense<0.000000e+00> : vector<8x128xf32>
    %89 = tpu.matmul %81, %6, %cst_33 {dimension_numbers = #tpu.dot_dimension_numbers<[1], [0], [0], [1], [0, 0, 1, 1], [], []>} : vector<8x128xf32>, vector<128x128xf32>, vector<8x128xf32> -> vector<8x128xf32>
    %90 = arith.addf %88, %89 : vector<8x128xf32>
    %cst_34 = arith.constant -1.000000e+30 : f32
    %91 = vector.shape_cast %5 : vector<1x128xi1> to vector<1x128xi1>
    %92 = vector.broadcast %91 : vector<1x128xi1> to vector<8x128xi1>
    %93 = vector.broadcast %cst_34 : f32 to vector<8x128xf32>
    %94 = arith.select %92, %90, %93 : vector<8x128xi1>, vector<8x128xf32>
    %cst_35 = arith.constant dense<0xFF800000> : vector<8xf32>
    %95 = vector.multi_reduction <maximumf>, %94, %cst_35 [1] : vector<8x128xf32> to vector<8xf32>
    %96 = vector.shape_cast %95 : vector<8xf32> to vector<8x1xf32>
    %97 = vector.broadcast %96 : vector<8x1xf32> to vector<8x128xf32>
    %98 = arith.subf %94, %97 : vector<8x128xf32>
    %99 = math.exp %98 : vector<8x128xf32>
    %cst_36 = arith.constant dense<0.000000e+00> : vector<8xf32>
    %100 = vector.multi_reduction <add>, %99, %cst_36 [1] : vector<8x128xf32> to vector<8xf32>
    %101 = vector.shape_cast %100 : vector<8xf32> to vector<8x1xf32>
    %102 = math.log %101 : vector<8x1xf32>
    %103 = arith.addf %96, %102 : vector<8x1xf32>
    %104 = vector.broadcast %103 : vector<8x1xf32> to vector<8x128xf32>
    %105 = vector.broadcast %3 : vector<1x128xf32> to vector<8x128xf32>
    %106 = arith.mulf %104, %105 : vector<8x128xf32>
    %107 = arith.subf %90, %106 : vector<8x128xf32>
    %108 = arith.index_cast %c3_i32 : i32 to index
    %c0_37 = arith.constant 0 : index
    %c0_38 = arith.constant 0 : index
    %109 = vector.load %arg6[%108, %c0_37, %c0_38] : memref<8x8x128xf32, #tpu.memory_space<vmem>>, vector<1x8x128xf32>
    %110 = vector.shape_cast %109 : vector<1x8x128xf32> to vector<8x128xf32>
    %111 = vector.shape_cast %107 : vector<8x128xf32> to vector<1x8x128xf32>
    tpu.vector_store %arg6[%108, %c0_37, %c0_38], %111 {strides = array<i32>} : memref<8x8x128xf32, #tpu.memory_space<vmem>>, vector<1x8x128xf32>,
    %c4_i32 = arith.constant 4 : i32
    %112 = arith.index_cast %c4_i32 : i32 to index
    %c0_39 = arith.constant 0 : index
    %c0_40 = arith.constant 0 : index
    %113 = vector.load %arg2[%112, %c0_39, %c0_40] : memref<8x8x128xf32, #tpu.memory_space<vmem>>, vector<1x8x128xf32>
    %114 = vector.shape_cast %113 : vector<1x8x128xf32> to vector<8x128xf32>
    %cst_41 = arith.constant dense<0.000000e+00> : vector<8x128xf32>
    %115 = tpu.matmul %107, %6, %cst_41 {dimension_numbers = #tpu.dot_dimension_numbers<[1], [0], [0], [1], [0, 0, 1, 1], [], []>} : vector<8x128xf32>, vector<128x128xf32>, vector<8x128xf32> -> vector<8x128xf32>
    %116 = arith.addf %114, %115 : vector<8x128xf32>
    %cst_42 = arith.constant -1.000000e+30 : f32
    %117 = vector.shape_cast %5 : vector<1x128xi1> to vector<1x128xi1>
    %118 = vector.broadcast %117 : vector<1x128xi1> to vector<8x128xi1>
    %119 = vector.broadcast %cst_42 : f32 to vector<8x128xf32>
    %120 = arith.select %118, %116, %119 : vector<8x128xi1>, vector<8x128xf32>
    %cst_43 = arith.constant dense<0xFF800000> : vector<8xf32>
    %121 = vector.multi_reduction <maximumf>, %120, %cst_43 [1] : vector<8x128xf32> to vector<8xf32>
    %122 = vector.shape_cast %121 : vector<8xf32> to vector<8x1xf32>
    %123 = vector.broadcast %122 : vector<8x1xf32> to vector<8x128xf32>
    %124 = arith.subf %120, %123 : vector<8x128xf32>
    %125 = math.exp %124 : vector<8x128xf32>
    %cst_44 = arith.constant dense<0.000000e+00> : vector<8xf32>
    %126 = vector.multi_reduction <add>, %125, %cst_44 [1] : vector<8x128xf32> to vector<8xf32>
    %127 = vector.shape_cast %126 : vector<8xf32> to vector<8x1xf32>
    %128 = math.log %127 : vector<8x1xf32>
    %129 = arith.addf %122, %128 : vector<8x1xf32>
    %130 = vector.broadcast %129 : vector<8x1xf32> to vector<8x128xf32>
    %131 = vector.broadcast %3 : vector<1x128xf32> to vector<8x128xf32>
    %132 = arith.mulf %130, %131 : vector<8x128xf32>
    %133 = arith.subf %116, %132 : vector<8x128xf32>
    %134 = arith.index_cast %c4_i32 : i32 to index
    %c0_45 = arith.constant 0 : index
    %c0_46 = arith.constant 0 : index
    %135 = vector.load %arg6[%134, %c0_45, %c0_46] : memref<8x8x128xf32, #tpu.memory_space<vmem>>, vector<1x8x128xf32>
    %136 = vector.shape_cast %135 : vector<1x8x128xf32> to vector<8x128xf32>
    %137 = vector.shape_cast %133 : vector<8x128xf32> to vector<1x8x128xf32>
    tpu.vector_store %arg6[%134, %c0_45, %c0_46], %137 {strides = array<i32>} : memref<8x8x128xf32, #tpu.memory_space<vmem>>, vector<1x8x128xf32>,
    %c5_i32 = arith.constant 5 : i32
    %138 = arith.index_cast %c5_i32 : i32 to index
    %c0_47 = arith.constant 0 : index
    %c0_48 = arith.constant 0 : index
    %139 = vector.load %arg2[%138, %c0_47, %c0_48] : memref<8x8x128xf32, #tpu.memory_space<vmem>>, vector<1x8x128xf32>
    %140 = vector.shape_cast %139 : vector<1x8x128xf32> to vector<8x128xf32>
    %cst_49 = arith.constant dense<0.000000e+00> : vector<8x128xf32>
    %141 = tpu.matmul %133, %6, %cst_49 {dimension_numbers = #tpu.dot_dimension_numbers<[1], [0], [0], [1], [0, 0, 1, 1], [], []>} : vector<8x128xf32>, vector<128x128xf32>, vector<8x128xf32> -> vector<8x128xf32>
    %142 = arith.addf %140, %141 : vector<8x128xf32>
    %cst_50 = arith.constant -1.000000e+30 : f32
    %143 = vector.shape_cast %5 : vector<1x128xi1> to vector<1x128xi1>
    %144 = vector.broadcast %143 : vector<1x128xi1> to vector<8x128xi1>
    %145 = vector.broadcast %cst_50 : f32 to vector<8x128xf32>
    %146 = arith.select %144, %142, %145 : vector<8x128xi1>, vector<8x128xf32>
    %cst_51 = arith.constant dense<0xFF800000> : vector<8xf32>
    %147 = vector.multi_reduction <maximumf>, %146, %cst_51 [1] : vector<8x128xf32> to vector<8xf32>
    %148 = vector.shape_cast %147 : vector<8xf32> to vector<8x1xf32>
    %149 = vector.broadcast %148 : vector<8x1xf32> to vector<8x128xf32>
    %150 = arith.subf %146, %149 : vector<8x128xf32>
    %151 = math.exp %150 : vector<8x128xf32>
    %cst_52 = arith.constant dense<0.000000e+00> : vector<8xf32>
    %152 = vector.multi_reduction <add>, %151, %cst_52 [1] : vector<8x128xf32> to vector<8xf32>
    %153 = vector.shape_cast %152 : vector<8xf32> to vector<8x1xf32>
    %154 = math.log %153 : vector<8x1xf32>
    %155 = arith.addf %148, %154 : vector<8x1xf32>
    %156 = vector.broadcast %155 : vector<8x1xf32> to vector<8x128xf32>
    %157 = vector.broadcast %3 : vector<1x128xf32> to vector<8x128xf32>
    %158 = arith.mulf %156, %157 : vector<8x128xf32>
    %159 = arith.subf %142, %158 : vector<8x128xf32>
    %160 = arith.index_cast %c5_i32 : i32 to index
    %c0_53 = arith.constant 0 : index
    %c0_54 = arith.constant 0 : index
    %161 = vector.load %arg6[%160, %c0_53, %c0_54] : memref<8x8x128xf32, #tpu.memory_space<vmem>>, vector<1x8x128xf32>
    %162 = vector.shape_cast %161 : vector<1x8x128xf32> to vector<8x128xf32>
    %163 = vector.shape_cast %159 : vector<8x128xf32> to vector<1x8x128xf32>
    tpu.vector_store %arg6[%160, %c0_53, %c0_54], %163 {strides = array<i32>} : memref<8x8x128xf32, #tpu.memory_space<vmem>>, vector<1x8x128xf32>,
    %c6_i32 = arith.constant 6 : i32
    %164 = arith.index_cast %c6_i32 : i32 to index
    %c0_55 = arith.constant 0 : index
    %c0_56 = arith.constant 0 : index
    %165 = vector.load %arg2[%164, %c0_55, %c0_56] : memref<8x8x128xf32, #tpu.memory_space<vmem>>, vector<1x8x128xf32>
    %166 = vector.shape_cast %165 : vector<1x8x128xf32> to vector<8x128xf32>
    %cst_57 = arith.constant dense<0.000000e+00> : vector<8x128xf32>
    %167 = tpu.matmul %159, %6, %cst_57 {dimension_numbers = #tpu.dot_dimension_numbers<[1], [0], [0], [1], [0, 0, 1, 1], [], []>} : vector<8x128xf32>, vector<128x128xf32>, vector<8x128xf32> -> vector<8x128xf32>
    %168 = arith.addf %166, %167 : vector<8x128xf32>
    %cst_58 = arith.constant -1.000000e+30 : f32
    %169 = vector.shape_cast %5 : vector<1x128xi1> to vector<1x128xi1>
    %170 = vector.broadcast %169 : vector<1x128xi1> to vector<8x128xi1>
    %171 = vector.broadcast %cst_58 : f32 to vector<8x128xf32>
    %172 = arith.select %170, %168, %171 : vector<8x128xi1>, vector<8x128xf32>
    %cst_59 = arith.constant dense<0xFF800000> : vector<8xf32>
    %173 = vector.multi_reduction <maximumf>, %172, %cst_59 [1] : vector<8x128xf32> to vector<8xf32>
    %174 = vector.shape_cast %173 : vector<8xf32> to vector<8x1xf32>
    %175 = vector.broadcast %174 : vector<8x1xf32> to vector<8x128xf32>
    %176 = arith.subf %172, %175 : vector<8x128xf32>
    %177 = math.exp %176 : vector<8x128xf32>
    %cst_60 = arith.constant dense<0.000000e+00> : vector<8xf32>
    %178 = vector.multi_reduction <add>, %177, %cst_60 [1] : vector<8x128xf32> to vector<8xf32>
    %179 = vector.shape_cast %178 : vector<8xf32> to vector<8x1xf32>
    %180 = math.log %179 : vector<8x1xf32>
    %181 = arith.addf %174, %180 : vector<8x1xf32>
    %182 = vector.broadcast %181 : vector<8x1xf32> to vector<8x128xf32>
    %183 = vector.broadcast %3 : vector<1x128xf32> to vector<8x128xf32>
    %184 = arith.mulf %182, %183 : vector<8x128xf32>
    %185 = arith.subf %168, %184 : vector<8x128xf32>
    %186 = arith.index_cast %c6_i32 : i32 to index
    %c0_61 = arith.constant 0 : index
    %c0_62 = arith.constant 0 : index
    %187 = vector.load %arg6[%186, %c0_61, %c0_62] : memref<8x8x128xf32, #tpu.memory_space<vmem>>, vector<1x8x128xf32>
    %188 = vector.shape_cast %187 : vector<1x8x128xf32> to vector<8x128xf32>
    %189 = vector.shape_cast %185 : vector<8x128xf32> to vector<1x8x128xf32>
    tpu.vector_store %arg6[%186, %c0_61, %c0_62], %189 {strides = array<i32>} : memref<8x8x128xf32, #tpu.memory_space<vmem>>, vector<1x8x128xf32>,
    %c7_i32 = arith.constant 7 : i32
    %190 = arith.index_cast %c7_i32 : i32 to index
    %c0_63 = arith.constant 0 : index
    %c0_64 = arith.constant 0 : index
    %191 = vector.load %arg2[%190, %c0_63, %c0_64] : memref<8x8x128xf32, #tpu.memory_space<vmem>>, vector<1x8x128xf32>
    %192 = vector.shape_cast %191 : vector<1x8x128xf32> to vector<8x128xf32>
    %cst_65 = arith.constant dense<0.000000e+00> : vector<8x128xf32>
    %193 = tpu.matmul %185, %6, %cst_65 {dimension_numbers = #tpu.dot_dimension_numbers<[1], [0], [0], [1], [0, 0, 1, 1], [], []>} : vector<8x128xf32>, vector<128x128xf32>, vector<8x128xf32> -> vector<8x128xf32>
    %194 = arith.addf %192, %193 : vector<8x128xf32>
    %cst_66 = arith.constant -1.000000e+30 : f32
    %195 = vector.shape_cast %5 : vector<1x128xi1> to vector<1x128xi1>
    %196 = vector.broadcast %195 : vector<1x128xi1> to vector<8x128xi1>
    %197 = vector.broadcast %cst_66 : f32 to vector<8x128xf32>
    %198 = arith.select %196, %194, %197 : vector<8x128xi1>, vector<8x128xf32>
    %cst_67 = arith.constant dense<0xFF800000> : vector<8xf32>
    %199 = vector.multi_reduction <maximumf>, %198, %cst_67 [1] : vector<8x128xf32> to vector<8xf32>
    %200 = vector.shape_cast %199 : vector<8xf32> to vector<8x1xf32>
    %201 = vector.broadcast %200 : vector<8x1xf32> to vector<8x128xf32>
    %202 = arith.subf %198, %201 : vector<8x128xf32>
    %203 = math.exp %202 : vector<8x128xf32>
    %cst_68 = arith.constant dense<0.000000e+00> : vector<8xf32>
    %204 = vector.multi_reduction <add>, %203, %cst_68 [1] : vector<8x128xf32> to vector<8xf32>
    %205 = vector.shape_cast %204 : vector<8xf32> to vector<8x1xf32>
    %206 = math.log %205 : vector<8x1xf32>
    %207 = arith.addf %200, %206 : vector<8x1xf32>
    %208 = vector.broadcast %207 : vector<8x1xf32> to vector<8x128xf32>
    %209 = vector.broadcast %3 : vector<1x128xf32> to vector<8x128xf32>
    %210 = arith.mulf %208, %209 : vector<8x128xf32>
    %211 = arith.subf %194, %210 : vector<8x128xf32>
    %212 = arith.index_cast %c7_i32 : i32 to index
    %c0_69 = arith.constant 0 : index
    %c0_70 = arith.constant 0 : index
    %213 = vector.load %arg6[%212, %c0_69, %c0_70] : memref<8x8x128xf32, #tpu.memory_space<vmem>>, vector<1x8x128xf32>
    %214 = vector.shape_cast %213 : vector<1x8x128xf32> to vector<8x128xf32>
    %215 = vector.shape_cast %211 : vector<8x128xf32> to vector<1x8x128xf32>
    tpu.vector_store %arg6[%212, %c0_69, %c0_70], %215 {strides = array<i32>} : memref<8x8x128xf32, #tpu.memory_space<vmem>>, vector<1x8x128xf32>,
    %c8_i32 = arith.constant 8 : i32
    %c0_71 = arith.constant 0 : index
    %c0_72 = arith.constant 0 : index
    %216 = vector.load %arg7[%c0_71, %c0_72] : memref<8x128xf32, #tpu.memory_space<vmem>>, vector<8x128xf32>
    tpu.vector_store %arg7[%c0_71, %c0_72], %211 {strides = array<i32>} : memref<8x128xf32, #tpu.memory_space<vmem>>, vector<8x128xf32>,
    return
  }
  func.func @transform_0(%arg0: i32, %arg1: i32) -> (i32, i32, i32) {
    %c0_i32 = arith.constant 0 : i32
    %c0_i32_0 = arith.constant 0 : i32
    return %arg1, %arg0, %c0_i32 : i32, i32, i32
  }
  func.func @transform_1(%arg0: i32, %arg1: i32) -> (i32, i32) {
    %c0_i32 = arith.constant 0 : i32
    %c0_i32_0 = arith.constant 0 : i32
    return %arg0, %c0_i32 : i32, i32
  }
  func.func @transform_2(%arg0: i32, %arg1: i32) -> (i32, i32) {
    %c0_i32 = arith.constant 0 : i32
    %c0_i32_0 = arith.constant 0 : i32
    %c0_i32_1 = arith.constant 0 : i32
    return %c0_i32, %c0_i32_0 : i32, i32
  }
  func.func @transform_3(%arg0: i32, %arg1: i32) -> (i32, i32) {
    %c0_i32 = arith.constant 0 : i32
    %c0_i32_0 = arith.constant 0 : i32
    %c0_i32_1 = arith.constant 0 : i32
    return %c0_i32, %c0_i32_0 : i32, i32
  }
  func.func @transform_4(%arg0: i32, %arg1: i32) -> (i32, i32, i32) {
    %c0_i32 = arith.constant 0 : i32
    %c0_i32_0 = arith.constant 0 : i32
    return %arg1, %arg0, %c0_i32 : i32, i32, i32
  }
}

</mosaic_0001>

<llo_original>
// kernel: rnn_sequence.1
$region0: #{rnn_sequence.1}
  #allocation0 [shape = 'u32[]', space=smem, size = 0x4, offset = 0x4, fixed_abs, tag = 'smem constant byte address 0x4 - core index']
  #allocation1 [shape = 'u32[144,128]{1,0:T(1,128)}', space=vmem, size = 0x12000, scoped, tag = 'internal scratch']
  #allocation2 [shape = 'f32[8,128]{1,0:T(8,128)}', space=vmem, size = 0x1000, scoped, tag = 'scratch operand']
  %s0 = inlined_call_operand.vmem [shape: f32[8,8,128], index: 0, kind: input, shape index: {}]
  %s1 = inlined_call_operand.vmem [shape: f32[8,128], index: 1, kind: input, shape index: {}]
  %s2 = inlined_call_operand.vmem [shape: f32[128,128], index: 2, kind: input, shape index: {}]
  %s3 = inlined_call_operand.vmem [shape: f32[1,128], index: 3, kind: input, shape index: {}]
  %s4 = inlined_call_operand.vmem [shape: f32[8,8,128], index: 4, kind: output, shape index: {}]
  %s5 = sld [smem:[#allocation0]]
  $region30: #{rnn_sequence.1} parent=0
    _
  %s7 = ssub.s32 1, %s5
  %s8 = scalar_select 0, %s7, %s5
  // Predicated region
  $region2: #{rnn_sequence.1} parent=0 // pred_check
    _
  $region3: #{rnn_sequence.1} parent=0 // pred_check_branch
    %10 = sbr.rel (0) target = $region5
  $region4: #{rnn_sequence.1} parent=0 // pred_region
    _
  $region5: #{rnn_sequence.1} parent=0 // pred_fallthru
    _
  // Predicated region
  $region6: #{rnn_sequence.1} parent=0 // pred_check
    _
  $region7: #{rnn_sequence.1} parent=0 // pred_check_branch
    %12 = sbr.rel (0) target = $region9
  $region8: #{rnn_sequence.1} parent=0 // pred_region
    _
  $region9: #{rnn_sequence.1} parent=0 // pred_fallthru
    _
  // Predicated region
  $region10: #{rnn_sequence.1} parent=0 // pred_check
    _
  $region11: #{rnn_sequence.1} parent=0 // pred_check_branch
    %14 = sbr.rel (0) target = $region13
  $region12: #{rnn_sequence.1} parent=0 // pred_region
    _
  $region13: #{rnn_sequence.1} parent=0 // pred_fallthru
    _
  // Predicated region
  $region14: #{rnn_sequence.1} parent=0 // pred_check
    _
  $region15: #{rnn_sequence.1} parent=0 // pred_check_branch
    %16 = sbr.rel (0) target = $region17
  $region16: #{rnn_sequence.1} parent=0 // pred_region
    _
  $region17: #{rnn_sequence.1} parent=0 // pred_fallthru
    _
  %p17 = scmp.eq.s32.totalorder 0, 0
  // Predicated region
  $region18: #{rnn_sequence.1} parent=0 // pred_check
    %p18 = pneg %p17
  $region19: #{rnn_sequence.1} parent=0 // pred_check_branch
    %20 = sbr.rel (%p18) target = $region21
  $region20: #{rnn_sequence.1} parent=0 // pred_region
    %v21 = vld [vmem:[%s1] sm:$0xff]
    %22 = vst [vmem:[#allocation2] sm:$0xff] %v21
  $region21: #{rnn_sequence.1} parent=0 // pred_fallthru
    _
  %v23 = vld [vmem:[%s3] sm:$0x1]
  %vm24 = vcmp.gt.f32.partialorder %v23, 0.0
  %v25 = vld [vmem:[%s2] sm:$0xff]
  %v26 = vld [vmem:[%s2 + $0x8] sm:$0xff]
  %v27 = vld [vmem:[%s2 + $0x10] sm:$0xff]
  %v28 = vld [vmem:[%s2 + $0x18] sm:$0xff]
  %v29 = vld [vmem:[%s2 + $0x20] sm:$0xff]
  %v30 = vld [vmem:[%s2 + $0x28] sm:$0xff]
  %v31 = vld [vmem:[%s2 + $0x30] sm:$0xff]
  %v32 = vld [vmem:[%s2 + $0x38] sm:$0xff]
  %v33 = vld [vmem:[%s2 + $0x40] sm:$0xff]
  %v34 = vld [vmem:[%s2 + $0x48] sm:$0xff]
  %v35 = vld [vmem:[%s2 + $0x50] sm:$0xff]
  %v36 = vld [vmem:[%s2 + $0x58] sm:$0xff]
  %v37 = vld [vmem:[%s2 + $0x60] sm:$0xff]
  %v38 = vld [vmem:[%s2 + $0x68] sm:$0xff]
  %v39 = vld [vmem:[%s2 + $0x70] sm:$0xff]
  %v40 = vld [vmem:[%s2 + $0x78] sm:$0xff]
  %v41 = vld [vmem:[#allocation2] sm:$0xff]
  %v42 = vld [vmem:[%s0] sm:$0xff]
  %43 = vmatprep.subr.mxu0 0.0
  %44 = vmatpush1.msra.mxu0 %v25
  %45 = vmatprep.subr.mxu0 0.0
  %46 = vmatpush1.msra.mxu0 %v26
  %47 = vmatprep.subr.mxu0 0.0
  %48 = vmatpush1.msra.mxu0 %v27
  %49 = vmatprep.subr.mxu0 0.0
  %50 = vmatpush1.msra.mxu0 %v28
  %51 = vmatprep.subr.mxu0 0.0
  %52 = vmatpush1.msra.mxu0 %v29
  %53 = vmatprep.subr.mxu0 0.0
  %54 = vmatpush1.msra.mxu0 %v30
  %55 = vmatprep.subr.mxu0 0.0
  %56 = vmatpush1.msra.mxu0 %v31
  %57 = vmatprep.subr.mxu0 0.0
  %58 = vmatpush1.msra.mxu0 %v32
  %59 = vmatprep.subr.mxu0 0.0
  %60 = vmatpush1.msra.mxu0 %v33
  %61 = vmatprep.subr.mxu0 0.0
  %62 = vmatpush1.msra.mxu0 %v34
  %63 = vmatprep.subr.mxu0 0.0
  %64 = vmatpush1.msra.mxu0 %v35
  %65 = vmatprep.subr.mxu0 0.0
  %66 = vmatpush1.msra.mxu0 %v36
  %67 = vmatprep.subr.mxu0 0.0
  %68 = vmatpush1.msra.mxu0 %v37
  %69 = vmatprep.subr.mxu0 0.0
  %70 = vmatpush1.msra.mxu0 %v38
  %71 = vmatprep.subr.mxu0 0.0
  %72 = vmatpush1.msra.mxu0 %v39
  %73 = vmatprep.subr.mxu0 0.0
  %74 = vmatpush1.msra.mxu0 %v40
  %75 = vmatprep.subr.mxu0 0.0
  %76 = vmatpush1.msra.mxu0 0.0
  %77 = vmatprep.subr.mxu0 0.0
  %78 = vmatpush1.msra.mxu0 0.0
  %79 = vmatprep.subr.mxu0 0.0
  %80 = vmatpush1.msra.mxu0 0.0
  %81 = vmatprep.subr.mxu0 0.0
  %82 = vmatpush1.msra.mxu0 0.0
  %83 = vmatprep.subr.mxu0 0.0
  %84 = vmatpush1.msra.mxu0 0.0
  %85 = vmatprep.subr.mxu0 0.0
  %86 = vmatpush1.msra.mxu0 0.0
  %87 = vmatprep.subr.mxu0 0.0
  %88 = vmatpush1.msra.mxu0 0.0
  %89 = vmatprep.subr.mxu0 0.0
  %90 = vmatpush1.msra.mxu0 0.0
  %91 = vmatprep.subr.mxu0 0.0
  %92 = vmatpush1.msra.mxu0 0.0
  %93 = vmatprep.subr.mxu0 0.0
  %94 = vmatpush1.msra.mxu0 0.0
  %95 = vmatprep.subr.mxu0 0.0
  %96 = vmatpush1.msra.mxu0 0.0
  %97 = vmatprep.subr.mxu0 0.0
  %98 = vmatpush1.msra.mxu0 0.0
  %99 = vmatprep.subr.mxu0 0.0
  %100 = vmatpush1.msra.mxu0 0.0
  %101 = vmatprep.subr.mxu0 0.0
  %102 = vmatpush1.msra.mxu0 0.0
  %103 = vmatprep.subr.mxu0 0.0
  %104 = vmatpush1.msra.mxu0 0.0
  %105 = vmatprep.subr.mxu0 0.0
  %106 = vmatpush1.msra.mxu0 0.0
  %107 = vmatprep.mubr.f32.mxu0 0.0
  %108 = vmatmul.mubr.f32.gmra.mrb[0].mxu0 %v41
  %v109 = vpop.f32.mrb[0].mxu0
  %v110 = vadd.f32 0.0, %v109
  %v111 = vpop.f32.mrb[0].mxu0
  %112 = vdwg.mxu0
  %v113 = vadd.f32 %v42, %v110
  %v114 = vsel %vm24, 1, 0
  %v115 = vlaneseq
  %v116 = vshrl.u32 %v115, 7
  %v117 = vsub.s32 0, %v116
  %v118 = vrot.slane %v114, %v117
  %vm119 = vcmp.eq.s32.totalorder %v118, 1
  %v120 = vsel %vm119, %v113, -1e+30
  %121 = vmax.xlane.f32.xlu0 %v120
  %v122 = vpop.xlane.xlu0 %121
  %v123 = vsub.f32 %v120, %v122
  %v124 = vmul.f32 %v123, 1.442695
  %v125 = vpow.pop %v124
  %126 = vadd.xlane.f32.xlu0 %v125
  %v127 = vpop.xlane.xlu0 %126
  %v128 = vlog2.pop %v127
  %v129 = vmul.f32 %v128, 0.6931472
  %v130 = vadd.f32 %v122, %v129
  %v132 = vlaneseq
  %v133 = vshrl.u32 %v132, 7
  %v134 = vsub.s32 0, %v133
  %v135 = vrot.slane %v23, %v134
  %v137 = vmul.f32 %v130, %v135
  %v138 = vsub.f32 %v113, %v137
  %139 = vst [vmem:[%s4] sm:$0xff] %v138
  %s140 = scalar_lea.vmem %s0, 8
  %v141 = vld [vmem:[%s140] sm:$0xff]
  %142 = vmatprep.subr.mxu0 0.0
  %143 = vmatpush1.msra.mxu0 %v25
  %144 = vmatprep.subr.mxu0 0.0
  %145 = vmatpush1.msra.mxu0 %v26
  %146 = vmatprep.subr.mxu0 0.0
  %147 = vmatpush1.msra.mxu0 %v27
  %148 = vmatprep.subr.mxu0 0.0
  %149 = vmatpush1.msra.mxu0 %v28
  %150 = vmatprep.subr.mxu0 0.0
  %151 = vmatpush1.msra.mxu0 %v29
  %152 = vmatprep.subr.mxu0 0.0
  %153 = vmatpush1.msra.mxu0 %v30
  %154 = vmatprep.subr.mxu0 0.0
  %155 = vmatpush1.msra.mxu0 %v31
  %156 = vmatprep.subr.mxu0 0.0
  %157 = vmatpush1.msra.mxu0 %v32
  %158 = vmatprep.subr.mxu0 0.0
  %159 = vmatpush1.msra.mxu0 %v33
  %160 = vmatprep.subr.mxu0 0.0
  %161 = vmatpush1.msra.mxu0 %v34
  %162 = vmatprep.subr.mxu0 0.0
  %163 = vmatpush1.msra.mxu0 %v35
  %164 = vmatprep.subr.mxu0 0.0
  %165 = vmatpush1.msra.mxu0 %v36
  %166 = vmatprep.subr.mxu0 0.0
  %167 = vmatpush1.msra.mxu0 %v37
  %168 = vmatprep.subr.mxu0 0.0
  %169 = vmatpush1.msra.mxu0 %v38
  %170 = vmatprep.subr.mxu0 0.0
  %171 = vmatpush1.msra.mxu0 %v39
  %172 = vmatprep.subr.mxu0 0.0
  %173 = vmatpush1.msra.mxu0 %v40
  %174 = vmatprep.subr.mxu0 0.0
  %175 = vmatpush1.msra.mxu0 0.0
  %176 = vmatprep.subr.mxu0 0.0
  %177 = vmatpush1.msra.mxu0 0.0
  %178 = vmatprep.subr.mxu0 0.0
  %179 = vmatpush1.msra.mxu0 0.0
  %180 = vmatprep.subr.mxu0 0.0
  %181 = vmatpush1.msra.mxu0 0.0
  %182 = vmatprep.subr.mxu0 0.0
  %183 = vmatpush1.msra.mxu0 0.0
  %184 = vmatprep.subr.mxu0 0.0
  %185 = vmatpush1.msra.mxu0 0.0
  %186 = vmatprep.subr.mxu0 0.0
  %187 = vmatpush1.msra.mxu0 0.0
  %188 = vmatprep.subr.mxu0 0.0
  %189 = vmatpush1.msra.mxu0 0.0
  %190 = vmatprep.subr.mxu0 0.0
  %191 = vmatpush1.msra.mxu0 0.0
  %192 = vmatprep.subr.mxu0 0.0
  %193 = vmatpush1.msra.mxu0 0.0
  %194 = vmatprep.subr.mxu0 0.0
  %195 = vmatpush1.msra.mxu0 0.0
  %196 = vmatprep.subr.mxu0 0.0
  %197 = vmatpush1.msra.mxu0 0.0
  %198 = vmatprep.subr.mxu0 0.0
  %199 = vmatpush1.msra.mxu0 0.0
  %200 = vmatprep.subr.mxu0 0.0
  %201 = vmatpush1.msra.mxu0 0.0
  %202 = vmatprep.subr.mxu0 0.0
  %203 = vmatpush1.msra.mxu0 0.0
  %204 = vmatprep.subr.mxu0 0.0
  %205 = vmatpush1.msra.mxu0 0.0
  %206 = vmatprep.mubr.f32.mxu0 0.0
  %207 = vmatmul.mubr.f32.gmra.mrb[0].mxu0 %v138
  %v208 = vpop.f32.mrb[0].mxu0
  %v209 = vadd.f32 0.0, %v208
  %v210 = vpop.f32.mrb[0].mxu0
  %211 = vdwg.mxu0
  %v212 = vadd.f32 %v141, %v209
  %v213 = vsel %vm119, %v212, -1e+30
  %214 = vmax.xlane.f32.xlu0 %v213
  %v215 = vpop.xlane.xlu0 %214
  %v216 = vsub.f32 %v213, %v215
  %v217 = vmul.f32 %v216, 1.442695
  %v218 = vpow.pop %v217
  %219 = vadd.xlane.f32.xlu0 %v218
  %v220 = vpop.xlane.xlu0 %219
  %v221 = vlog2.pop %v220
  %v222 = vmul.f32 %v221, 0.6931472
  %v223 = vadd.f32 %v215, %v222
  %v224 = vmul.f32 %v223, %v135
  %v225 = vsub.f32 %v212, %v224
  %s226 = scalar_lea.vmem %s4, 8
  %227 = vst [vmem:[%s226] sm:$0xff] %v225
  %s228 = scalar_lea.vmem %s0, 16
  %v229 = vld [vmem:[%s228] sm:$0xff]
  %230 = vmatprep.subr.mxu0 0.0
  %231 = vmatpush1.msra.mxu0 %v25
  %232 = vmatprep.subr.mxu0 0.0
  %233 = vmatpush1.msra.mxu0 %v26
  %234 = vmatprep.subr.mxu0 0.0
  %235 = vmatpush1.msra.mxu0 %v27
  %236 = vmatprep.subr.mxu0 0.0
  %237 = vmatpush1.msra.mxu0 %v28
  %238 = vmatprep.subr.mxu0 0.0
  %239 = vmatpush1.msra.mxu0 %v29
  %240 = vmatprep.subr.mxu0 0.0
  %241 = vmatpush1.msra.mxu0 %v30
  %242 = vmatprep.subr.mxu0 0.0
  %243 = vmatpush1.msra.mxu0 %v31
  %244 = vmatprep.subr.mxu0 0.0
  %245 = vmatpush1.msra.mxu0 %v32
  %246 = vmatprep.subr.mxu0 0.0
  %247 = vmatpush1.msra.mxu0 %v33
  %248 = vmatprep.subr.mxu0 0.0
  %249 = vmatpush1.msra.mxu0 %v34
  %250 = vmatprep.subr.mxu0 0.0
  %251 = vmatpush1.msra.mxu0 %v35
  %252 = vmatprep.subr.mxu0 0.0
  %253 = vmatpush1.msra.mxu0 %v36
  %254 = vmatprep.subr.mxu0 0.0
  %255 = vmatpush1.msra.mxu0 %v37
  %256 = vmatprep.subr.mxu0 0.0
  %257 = vmatpush1.msra.mxu0 %v38
  %258 = vmatprep.subr.mxu0 0.0
  %259 = vmatpush1.msra.mxu0 %v39
  %260 = vmatprep.subr.mxu0 0.0
  %261 = vmatpush1.msra.mxu0 %v40
  %262 = vmatprep.subr.mxu0 0.0
  %263 = vmatpush1.msra.mxu0 0.0
  %264 = vmatprep.subr.mxu0 0.0
  %265 = vmatpush1.msra.mxu0 0.0
  %266 = vmatprep.subr.mxu0 0.0
  %267 = vmatpush1.msra.mxu0 0.0
  %268 = vmatprep.subr.mxu0 0.0
  %269 = vmatpush1.msra.mxu0 0.0
  %270 = vmatprep.subr.mxu0 0.0
  %271 = vmatpush1.msra.mxu0 0.0
  %272 = vmatprep.subr.mxu0 0.0
  %273 = vmatpush1.msra.mxu0 0.0
  %274 = vmatprep.subr.mxu0 0.0
  %275 = vmatpush1.msra.mxu0 0.0
  %276 = vmatprep.subr.mxu0 0.0
  %277 = vmatpush1.msra.mxu0 0.0
  %278 = vmatprep.subr.mxu0 0.0
  %279 = vmatpush1.msra.mxu0 0.0
  %280 = vmatprep.subr.mxu0 0.0
  %281 = vmatpush1.msra.mxu0 0.0
  %282 = vmatprep.subr.mxu0 0.0
  %283 = vmatpush1.msra.mxu0 0.0
  %284 = vmatprep.subr.mxu0 0.0
  %285 = vmatpush1.msra.mxu0 0.0
  %286 = vmatprep.subr.mxu0 0.0
  %287 = vmatpush1.msra.mxu0 0.0
  %288 = vmatprep.subr.mxu0 0.0
  %289 = vmatpush1.msra.mxu0 0.0
  %290 = vmatprep.subr.mxu0 0.0
  %291 = vmatpush1.msra.mxu0 0.0
  %292 = vmatprep.subr.mxu0 0.0
  %293 = vmatpush1.msra.mxu0 0.0
  %294 = vmatprep.mubr.f32.mxu0 0.0
  %295 = vmatmul.mubr.f32.gmra.mrb[0].mxu0 %v225
  %v296 = vpop.f32.mrb[0].mxu0
  %v297 = vadd.f32 0.0, %v296
  %v298 = vpop.f32.mrb[0].mxu0
  %299 = vdwg.mxu0
  %v300 = vadd.f32 %v229, %v297
  %v301 = vsel %vm119, %v300, -1e+30
  %302 = vmax.xlane.f32.xlu0 %v301
  %v303 = vpop.xlane.xlu0 %302
  %v304 = vsub.f32 %v301, %v303
  %v305 = vmul.f32 %v304, 1.442695
  %v306 = vpow.pop %v305
  %307 = vadd.xlane.f32.xlu0 %v306
  %v308 = vpop.xlane.xlu0 %307
  %v309 = vlog2.pop %v308
  %v310 = vmul.f32 %v309, 0.6931472
  %v311 = vadd.f32 %v303, %v310
  %v312 = vmul.f32 %v311, %v135
  %v313 = vsub.f32 %v300, %v312
  %s314 = scalar_lea.vmem %s4, 16
  %315 = vst [vmem:[%s314] sm:$0xff] %v313
  %s316 = scalar_lea.vmem %s0, 24
  %v317 = vld [vmem:[%s316] sm:$0xff]
  %318 = vmatprep.subr.mxu0 0.0
  %319 = vmatpush1.msra.mxu0 %v25
  %320 = vmatprep.subr.mxu0 0.0
  %321 = vmatpush1.msra.mxu0 %v26
  %322 = vmatprep.subr.mxu0 0.0
  %323 = vmatpush1.msra.mxu0 %v27
  %324 = vmatprep.subr.mxu0 0.0
  %325 = vmatpush1.msra.mxu0 %v28
  %326 = vmatprep.subr.mxu0 0.0
  %327 = vmatpush1.msra.mxu0 %v29
  %328 = vmatprep.subr.mxu0 0.0
  %329 = vmatpush1.msra.mxu0 %v30
  %330 = vmatprep.subr.mxu0 0.0
  %331 = vmatpush1.msra.mxu0 %v31
  %332 = vmatprep.subr.mxu0 0.0
  %333 = vmatpush1.msra.mxu0 %v32
  %334 = vmatprep.subr.mxu0 0.0
  %335 = vmatpush1.msra.mxu0 %v33
  %336 = vmatprep.subr.mxu0 0.0
  %337 = vmatpush1.msra.mxu0 %v34
  %338 = vmatprep.subr.mxu0 0.0
  %339 = vmatpush1.msra.mxu0 %v35
  %340 = vmatprep.subr.mxu0 0.0
  %341 = vmatpush1.msra.mxu0 %v36
  %342 = vmatprep.subr.mxu0 0.0
  %343 = vmatpush1.msra.mxu0 %v37
  %344 = vmatprep.subr.mxu0 0.0
  %345 = vmatpush1.msra.mxu0 %v38
  %346 = vmatprep.subr.mxu0 0.0
  %347 = vmatpush1.msra.mxu0 %v39
  %348 = vmatprep.subr.mxu0 0.0
  %349 = vmatpush1.msra.mxu0 %v40
  %350 = vmatprep.subr.mxu0 0.0
  %351 = vmatpush1.msra.mxu0 0.0
  %352 = vmatprep.subr.mxu0 0.0
  %353 = vmatpush1.msra.mxu0 0.0
  %354 = vmatprep.subr.mxu0 0.0
  %355 = vmatpush1.msra.mxu0 0.0
  %356 = vmatprep.subr.mxu0 0.0
  %357 = vmatpush1.msra.mxu0 0.0
  %358 = vmatprep.subr.mxu0 0.0
  %359 = vmatpush1.msra.mxu0 0.0
  %360 = vmatprep.subr.mxu0 0.0
  %361 = vmatpush1.msra.mxu0 0.0
  %362 = vmatprep.subr.mxu0 0.0
  %363 = vmatpush1.msra.mxu0 0.0
  %364 = vmatprep.subr.mxu0 0.0
  %365 = vmatpush1.msra.mxu0 0.0
  %366 = vmatprep.subr.mxu0 0.0
  %367 = vmatpush1.msra.mxu0 0.0
  %368 = vmatprep.subr.mxu0 0.0
  %369 = vmatpush1.msra.mxu0 0.0
  %370 = vmatprep.subr.mxu0 0.0
  %371 = vmatpush1.msra.mxu0 0.0
  %372 = vmatprep.subr.mxu0 0.0
  %373 = vmatpush1.msra.mxu0 0.0
  %374 = vmatprep.subr.mxu0 0.0
  %375 = vmatpush1.msra.mxu0 0.0
  %376 = vmatprep.subr.mxu0 0.0
  %377 = vmatpush1.msra.mxu0 0.0
  %378 = vmatprep.subr.mxu0 0.0
  %379 = vmatpush1.msra.mxu0 0.0
  %380 = vmatprep.subr.mxu0 0.0
  %381 = vmatpush1.msra.mxu0 0.0
  %382 = vmatprep.mubr.f32.mxu0 0.0
  %383 = vmatmul.mubr.f32.gmra.mrb[0].mxu0 %v313
  %v384 = vpop.f32.mrb[0].mxu0
  %v385 = vadd.f32 0.0, %v384
  %v386 = vpop.f32.mrb[0].mxu0
  %387 = vdwg.mxu0
  %v388 = vadd.f32 %v317, %v385
  %v389 = vsel %vm119, %v388, -1e+30
  %390 = vmax.xlane.f32.xlu0 %v389
  %v391 = vpop.xlane.xlu0 %390
  %v392 = vsub.f32 %v389, %v391
  %v393 = vmul.f32 %v392, 1.442695
  %v394 = vpow.pop %v393
  %395 = vadd.xlane.f32.xlu0 %v394
  %v396 = vpop.xlane.xlu0 %395
  %v397 = vlog2.pop %v396
  %v398 = vmul.f32 %v397, 0.6931472
  %v399 = vadd.f32 %v391, %v398
  %v400 = vmul.f32 %v399, %v135
  %v401 = vsub.f32 %v388, %v400
  %s402 = scalar_lea.vmem %s4, 24
  %403 = vst [vmem:[%s402] sm:$0xff] %v401
  %s404 = scalar_lea.vmem %s0, 32
  %v405 = vld [vmem:[%s404] sm:$0xff]
  %406 = vmatprep.subr.mxu0 0.0
  %407 = vmatpush1.msra.mxu0 %v25
  %408 = vmatprep.subr.mxu0 0.0
  %409 = vmatpush1.msra.mxu0 %v26
  %410 = vmatprep.subr.mxu0 0.0
  %411 = vmatpush1.msra.mxu0 %v27
  %412 = vmatprep.subr.mxu0 0.0
  %413 = vmatpush1.msra.mxu0 %v28
  %414 = vmatprep.subr.mxu0 0.0
  %415 = vmatpush1.msra.mxu0 %v29
  %416 = vmatprep.subr.mxu0 0.0
  %417 = vmatpush1.msra.mxu0 %v30
  %418 = vmatprep.subr.mxu0 0.0
  %419 = vmatpush1.msra.mxu0 %v31
  %420 = vmatprep.subr.mxu0 0.0
  %421 = vmatpush1.msra.mxu0 %v32
  %422 = vmatprep.subr.mxu0 0.0
  %423 = vmatpush1.msra.mxu0 %v33
  %424 = vmatprep.subr.mxu0 0.0
  %425 = vmatpush1.msra.mxu0 %v34
  %426 = vmatprep.subr.mxu0 0.0
  %427 = vmatpush1.msra.mxu0 %v35
  %428 = vmatprep.subr.mxu0 0.0
  %429 = vmatpush1.msra.mxu0 %v36
  %430 = vmatprep.subr.mxu0 0.0
  %431 = vmatpush1.msra.mxu0 %v37
  %432 = vmatprep.subr.mxu0 0.0
  %433 = vmatpush1.msra.mxu0 %v38
  %434 = vmatprep.subr.mxu0 0.0
  %435 = vmatpush1.msra.mxu0 %v39
  %436 = vmatprep.subr.mxu0 0.0
  %437 = vmatpush1.msra.mxu0 %v40
  %438 = vmatprep.subr.mxu0 0.0
  %439 = vmatpush1.msra.mxu0 0.0
  %440 = vmatprep.subr.mxu0 0.0
  %441 = vmatpush1.msra.mxu0 0.0
  %442 = vmatprep.subr.mxu0 0.0
  %443 = vmatpush1.msra.mxu0 0.0
  %444 = vmatprep.subr.mxu0 0.0
  %445 = vmatpush1.msra.mxu0 0.0
  %446 = vmatprep.subr.mxu0 0.0
  %447 = vmatpush1.msra.mxu0 0.0
  %448 = vmatprep.subr.mxu0 0.0
  %449 = vmatpush1.msra.mxu0 0.0
  %450 = vmatprep.subr.mxu0 0.0
  %451 = vmatpush1.msra.mxu0 0.0
  %452 = vmatprep.subr.mxu0 0.0
  %453 = vmatpush1.msra.mxu0 0.0
  %454 = vmatprep.subr.mxu0 0.0
  %455 = vmatpush1.msra.mxu0 0.0
  %456 = vmatprep.subr.mxu0 0.0
  %457 = vmatpush1.msra.mxu0 0.0
  %458 = vmatprep.subr.mxu0 0.0
  %459 = vmatpush1.msra.mxu0 0.0
  %460 = vmatprep.subr.mxu0 0.0
  %461 = vmatpush1.msra.mxu0 0.0
  %462 = vmatprep.subr.mxu0 0.0
  %463 = vmatpush1.msra.mxu0 0.0
  %464 = vmatprep.subr.mxu0 0.0
  %465 = vmatpush1.msra.mxu0 0.0
  %466 = vmatprep.subr.mxu0 0.0
  %467 = vmatpush1.msra.mxu0 0.0
  %468 = vmatprep.subr.mxu0 0.0
  %469 = vmatpush1.msra.mxu0 0.0
  %470 = vmatprep.mubr.f32.mxu0 0.0
  %471 = vmatmul.mubr.f32.gmra.mrb[0].mxu0 %v401
  %v472 = vpop.f32.mrb[0].mxu0
  %v473 = vadd.f32 0.0, %v472
  %v474 = vpop.f32.mrb[0].mxu0
  %475 = vdwg.mxu0
  %v476 = vadd.f32 %v405, %v473
  %v477 = vsel %vm119, %v476, -1e+30
  %478 = vmax.xlane.f32.xlu0 %v477
  %v479 = vpop.xlane.xlu0 %478
  %v480 = vsub.f32 %v477, %v479
  %v481 = vmul.f32 %v480, 1.442695
  %v482 = vpow.pop %v481
  %483 = vadd.xlane.f32.xlu0 %v482
  %v484 = vpop.xlane.xlu0 %483
  %v485 = vlog2.pop %v484
  %v486 = vmul.f32 %v485, 0.6931472
  %v487 = vadd.f32 %v479, %v486
  %v488 = vmul.f32 %v487, %v135
  %v489 = vsub.f32 %v476, %v488
  %s490 = scalar_lea.vmem %s4, 32
  %491 = vst [vmem:[%s490] sm:$0xff] %v489
  %s492 = scalar_lea.vmem %s0, 40
  %v493 = vld [vmem:[%s492] sm:$0xff]
  %494 = vmatprep.subr.mxu0 0.0
  %495 = vmatpush1.msra.mxu0 %v25
  %496 = vmatprep.subr.mxu0 0.0
  %497 = vmatpush1.msra.mxu0 %v26
  %498 = vmatprep.subr.mxu0 0.0
  %499 = vmatpush1.msra.mxu0 %v27
  %500 = vmatprep.subr.mxu0 0.0
  %501 = vmatpush1.msra.mxu0 %v28
  %502 = vmatprep.subr.mxu0 0.0
  %503 = vmatpush1.msra.mxu0 %v29
  %504 = vmatprep.subr.mxu0 0.0
  %505 = vmatpush1.msra.mxu0 %v30
  %506 = vmatprep.subr.mxu0 0.0
  %507 = vmatpush1.msra.mxu0 %v31
  %508 = vmatprep.subr.mxu0 0.0
  %509 = vmatpush1.msra.mxu0 %v32
  %510 = vmatprep.subr.mxu0 0.0
  %511 = vmatpush1.msra.mxu0 %v33
  %512 = vmatprep.subr.mxu0 0.0
  %513 = vmatpush1.msra.mxu0 %v34
  %514 = vmatprep.subr.mxu0 0.0
  %515 = vmatpush1.msra.mxu0 %v35
  %516 = vmatprep.subr.mxu0 0.0
  %517 = vmatpush1.msra.mxu0 %v36
  %518 = vmatprep.subr.mxu0 0.0
  %519 = vmatpush1.msra.mxu0 %v37
  %520 = vmatprep.subr.mxu0 0.0
  %521 = vmatpush1.msra.mxu0 %v38
  %522 = vmatprep.subr.mxu0 0.0
  %523 = vmatpush1.msra.mxu0 %v39
  %524 = vmatprep.subr.mxu0 0.0
  %525 = vmatpush1.msra.mxu0 %v40
  %526 = vmatprep.subr.mxu0 0.0
  %527 = vmatpush1.msra.mxu0 0.0
  %528 = vmatprep.subr.mxu0 0.0
  %529 = vmatpush1.msra.mxu0 0.0
  %530 = vmatprep.subr.mxu0 0.0
  %531 = vmatpush1.msra.mxu0 0.0
  %532 = vmatprep.subr.mxu0 0.0
  %533 = vmatpush1.msra.mxu0 0.0
  %534 = vmatprep.subr.mxu0 0.0
  %535 = vmatpush1.msra.mxu0 0.0
  %536 = vmatprep.subr.mxu0 0.0
  %537 = vmatpush1.msra.mxu0 0.0
  %538 = vmatprep.subr.mxu0 0.0
  %539 = vmatpush1.msra.mxu0 0.0
  %540 = vmatprep.subr.mxu0 0.0
  %541 = vmatpush1.msra.mxu0 0.0
  %542 = vmatprep.subr.mxu0 0.0
  %543 = vmatpush1.msra.mxu0 0.0
  %544 = vmatprep.subr.mxu0 0.0
  %545 = vmatpush1.msra.mxu0 0.0
  %546 = vmatprep.subr.mxu0 0.0
  %547 = vmatpush1.msra.mxu0 0.0
  %548 = vmatprep.subr.mxu0 0.0
  %549 = vmatpush1.msra.mxu0 0.0
  %550 = vmatprep.subr.mxu0 0.0
  %551 = vmatpush1.msra.mxu0 0.0
  %552 = vmatprep.subr.mxu0 0.0
  %553 = vmatpush1.msra.mxu0 0.0
  %554 = vmatprep.subr.mxu0 0.0
  %555 = vmatpush1.msra.mxu0 0.0
  %556 = vmatprep.subr.mxu0 0.0
  %557 = vmatpush1.msra.mxu0 0.0
  %558 = vmatprep.mubr.f32.mxu0 0.0
  %559 = vmatmul.mubr.f32.gmra.mrb[0].mxu0 %v489
  %v560 = vpop.f32.mrb[0].mxu0
  %v561 = vadd.f32 0.0, %v560
  %v562 = vpop.f32.mrb[0].mxu0
  %563 = vdwg.mxu0
  %v564 = vadd.f32 %v493, %v561
  %v565 = vsel %vm119, %v564, -1e+30
  %566 = vmax.xlane.f32.xlu0 %v565
  %v567 = vpop.xlane.xlu0 %566
  %v568 = vsub.f32 %v565, %v567
  %v569 = vmul.f32 %v568, 1.442695
  %v570 = vpow.pop %v569
  %571 = vadd.xlane.f32.xlu0 %v570
  %v572 = vpop.xlane.xlu0 %571
  %v573 = vlog2.pop %v572
  %v574 = vmul.f32 %v573, 0.6931472
  %v575 = vadd.f32 %v567, %v574
  %v576 = vmul.f32 %v575, %v135
  %v577 = vsub.f32 %v564, %v576
  %s578 = scalar_lea.vmem %s4, 40
  %579 = vst [vmem:[%s578] sm:$0xff] %v577
  %s580 = scalar_lea.vmem %s0, 48
  %v581 = vld [vmem:[%s580] sm:$0xff]
  %582 = vmatprep.subr.mxu0 0.0
  %583 = vmatpush1.msra.mxu0 %v25
  %584 = vmatprep.subr.mxu0 0.0
  %585 = vmatpush1.msra.mxu0 %v26
  %586 = vmatprep.subr.mxu0 0.0
  %587 = vmatpush1.msra.mxu0 %v27
  %588 = vmatprep.subr.mxu0 0.0
  %589 = vmatpush1.msra.mxu0 %v28
  %590 = vmatprep.subr.mxu0 0.0
  %591 = vmatpush1.msra.mxu0 %v29
  %592 = vmatprep.subr.mxu0 0.0
  %593 = vmatpush1.msra.mxu0 %v30
  %594 = vmatprep.subr.mxu0 0.0
  %595 = vmatpush1.msra.mxu0 %v31
  %596 = vmatprep.subr.mxu0 0.0
  %597 = vmatpush1.msra.mxu0 %v32
  %598 = vmatprep.subr.mxu0 0.0
  %599 = vmatpush1.msra.mxu0 %v33
  %600 = vmatprep.subr.mxu0 0.0
  %601 = vmatpush1.msra.mxu0 %v34
  %602 = vmatprep.subr.mxu0 0.0
  %603 = vmatpush1.msra.mxu0 %v35
  %604 = vmatprep.subr.mxu0 0.0
  %605 = vmatpush1.msra.mxu0 %v36
  %606 = vmatprep.subr.mxu0 0.0
  %607 = vmatpush1.msra.mxu0 %v37
  %608 = vmatprep.subr.mxu0 0.0
  %609 = vmatpush1.msra.mxu0 %v38
  %610 = vmatprep.subr.mxu0 0.0
  %611 = vmatpush1.msra.mxu0 %v39
  %612 = vmatprep.subr.mxu0 0.0
  %613 = vmatpush1.msra.mxu0 %v40
  %614 = vmatprep.subr.mxu0 0.0
  %615 = vmatpush1.msra.mxu0 0.0
  %616 = vmatprep.subr.mxu0 0.0
  %617 = vmatpush1.msra.mxu0 0.0
  %618 = vmatprep.subr.mxu0 0.0
  %619 = vmatpush1.msra.mxu0 0.0
  %620 = vmatprep.subr.mxu0 0.0
  %621 = vmatpush1.msra.mxu0 0.0
  %622 = vmatprep.subr.mxu0 0.0
  %623 = vmatpush1.msra.mxu0 0.0
  %624 = vmatprep.subr.mxu0 0.0
  %625 = vmatpush1.msra.mxu0 0.0
  %626 = vmatprep.subr.mxu0 0.0
  %627 = vmatpush1.msra.mxu0 0.0
  %628 = vmatprep.subr.mxu0 0.0
  %629 = vmatpush1.msra.mxu0 0.0
  %630 = vmatprep.subr.mxu0 0.0
  %631 = vmatpush1.msra.mxu0 0.0
  %632 = vmatprep.subr.mxu0 0.0
  %633 = vmatpush1.msra.mxu0 0.0
  %634 = vmatprep.subr.mxu0 0.0
  %635 = vmatpush1.msra.mxu0 0.0
  %636 = vmatprep.subr.mxu0 0.0
  %637 = vmatpush1.msra.mxu0 0.0
  %638 = vmatprep.subr.mxu0 0.0
  %639 = vmatpush1.msra.mxu0 0.0
  %640 = vmatprep.subr.mxu0 0.0
  %641 = vmatpush1.msra.mxu0 0.0
  %642 = vmatprep.subr.mxu0 0.0
  %643 = vmatpush1.msra.mxu0 0.0
  %644 = vmatprep.subr.mxu0 0.0
  %645 = vmatpush1.msra.mxu0 0.0
  %646 = vmatprep.mubr.f32.mxu0 0.0
  %647 = vmatmul.mubr.f32.gmra.mrb[0].mxu0 %v577
  %v648 = vpop.f32.mrb[0].mxu0
  %v649 = vadd.f32 0.0, %v648
  %v650 = vpop.f32.mrb[0].mxu0
  %651 = vdwg.mxu0
  %v652 = vadd.f32 %v581, %v649
  %v653 = vsel %vm119, %v652, -1e+30
  %654 = vmax.xlane.f32.xlu0 %v653
  %v655 = vpop.xlane.xlu0 %654
  %v656 = vsub.f32 %v653, %v655
  %v657 = vmul.f32 %v656, 1.442695
  %v658 = vpow.pop %v657
  %659 = vadd.xlane.f32.xlu0 %v658
  %v660 = vpop.xlane.xlu0 %659
  %v661 = vlog2.pop %v660
  %v662 = vmul.f32 %v661, 0.6931472
  %v663 = vadd.f32 %v655, %v662
  %v664 = vmul.f32 %v663, %v135
  %v665 = vsub.f32 %v652, %v664
  %s666 = scalar_lea.vmem %s4, 48
  %667 = vst [vmem:[%s666] sm:$0xff] %v665
  %s668 = scalar_lea.vmem %s0, 56
  %v669 = vld [vmem:[%s668] sm:$0xff]
  %670 = vmatprep.subr.mxu0 0.0
  %671 = vmatpush1.msra.mxu0 %v25
  %672 = vmatprep.subr.mxu0 0.0
  %673 = vmatpush1.msra.mxu0 %v26
  %674 = vmatprep.subr.mxu0 0.0
  %675 = vmatpush1.msra.mxu0 %v27
  %676 = vmatprep.subr.mxu0 0.0
  %677 = vmatpush1.msra.mxu0 %v28
  %678 = vmatprep.subr.mxu0 0.0
  %679 = vmatpush1.msra.mxu0 %v29
  %680 = vmatprep.subr.mxu0 0.0
  %681 = vmatpush1.msra.mxu0 %v30
  %682 = vmatprep.subr.mxu0 0.0
  %683 = vmatpush1.msra.mxu0 %v31
  %684 = vmatprep.subr.mxu0 0.0
  %685 = vmatpush1.msra.mxu0 %v32
  %686 = vmatprep.subr.mxu0 0.0
  %687 = vmatpush1.msra.mxu0 %v33
  %688 = vmatprep.subr.mxu0 0.0
  %689 = vmatpush1.msra.mxu0 %v34
  %690 = vmatprep.subr.mxu0 0.0
  %691 = vmatpush1.msra.mxu0 %v35
  %692 = vmatprep.subr.mxu0 0.0
  %693 = vmatpush1.msra.mxu0 %v36
  %694 = vmatprep.subr.mxu0 0.0
  %695 = vmatpush1.msra.mxu0 %v37
  %696 = vmatprep.subr.mxu0 0.0
  %697 = vmatpush1.msra.mxu0 %v38
  %698 = vmatprep.subr.mxu0 0.0
  %699 = vmatpush1.msra.mxu0 %v39
  %700 = vmatprep.subr.mxu0 0.0
  %701 = vmatpush1.msra.mxu0 %v40
  %702 = vmatprep.subr.mxu0 0.0
  %703 = vmatpush1.msra.mxu0 0.0
  %704 = vmatprep.subr.mxu0 0.0
  %705 = vmatpush1.msra.mxu0 0.0
  %706 = vmatprep.subr.mxu0 0.0
  %707 = vmatpush1.msra.mxu0 0.0
  %708 = vmatprep.subr.mxu0 0.0
  %709 = vmatpush1.msra.mxu0 0.0
  %710 = vmatprep.subr.mxu0 0.0
  %711 = vmatpush1.msra.mxu0 0.0
  %712 = vmatprep.subr.mxu0 0.0
  %713 = vmatpush1.msra.mxu0 0.0
  %714 = vmatprep.subr.mxu0 0.0
  %715 = vmatpush1.msra.mxu0 0.0
  %716 = vmatprep.subr.mxu0 0.0
  %717 = vmatpush1.msra.mxu0 0.0
  %718 = vmatprep.subr.mxu0 0.0
  %719 = vmatpush1.msra.mxu0 0.0
  %720 = vmatprep.subr.mxu0 0.0
  %721 = vmatpush1.msra.mxu0 0.0
  %722 = vmatprep.subr.mxu0 0.0
  %723 = vmatpush1.msra.mxu0 0.0
  %724 = vmatprep.subr.mxu0 0.0
  %725 = vmatpush1.msra.mxu0 0.0
  %726 = vmatprep.subr.mxu0 0.0
  %727 = vmatpush1.msra.mxu0 0.0
  %728 = vmatprep.subr.mxu0 0.0
  %729 = vmatpush1.msra.mxu0 0.0
  %730 = vmatprep.subr.mxu0 0.0
  %731 = vmatpush1.msra.mxu0 0.0
  %732 = vmatprep.subr.mxu0 0.0
  %733 = vmatpush1.msra.mxu0 0.0
  %734 = vmatprep.mubr.f32.mxu0 0.0
  %735 = vmatmul.mubr.f32.gmra.mrb[0].mxu0 %v665
  %v736 = vpop.f32.mrb[0].mxu0
  %v737 = vadd.f32 0.0, %v736
  %v738 = vpop.f32.mrb[0].mxu0
  %739 = vdwg.mxu0
  %v740 = vadd.f32 %v669, %v737
  %v741 = vsel %vm119, %v740, -1e+30
  %742 = vmax.xlane.f32.xlu0 %v741
  %v743 = vpop.xlane.xlu0 %742
  %v744 = vsub.f32 %v741, %v743
  %v745 = vmul.f32 %v744, 1.442695
  %v746 = vpow.pop %v745
  %747 = vadd.xlane.f32.xlu0 %v746
  %v748 = vpop.xlane.xlu0 %747
  %v749 = vlog2.pop %v748
  %v750 = vmul.f32 %v749, 0.6931472
  %v751 = vadd.f32 %v743, %v750
  %v752 = vmul.f32 %v751, %v135
  %v753 = vsub.f32 %v740, %v752
  %s754 = scalar_lea.vmem %s4, 56
  %755 = vst [vmem:[%s754] sm:$0xff] %v753
  %756 = vst [vmem:[#allocation2] sm:$0xff] %v753
  // Predicated region
  $region22: #{rnn_sequence.1} parent=0 // pred_check
    _
  $region23: #{rnn_sequence.1} parent=0 // pred_check_branch
    %758 = sbr.rel (0) target = $region25
  $region24: #{rnn_sequence.1} parent=0 // pred_region
    _
  $region25: #{rnn_sequence.1} parent=0 // pred_fallthru
    _
  // Predicated region
  $region26: #{rnn_sequence.1} parent=0 // pred_check
    _
  $region27: #{rnn_sequence.1} parent=0 // pred_check_branch
    %760 = sbr.rel (0) target = $region29
  $region28: #{rnn_sequence.1} parent=0 // pred_region
    _
  $region29: #{rnn_sequence.1} parent=0 // pred_fallthru
    _

</llo_original>
